<compile_context>
chip_gen: v6e
topology: v6e:2x2x1
jax: 0.10.0
libtpu: 0.0.40
codegen_flags: <defaults>
</compile_context>

<pallas_src>
import functools

import jax
import jax.numpy as jnp
from jax.experimental import pallas as pl
from jax.experimental.pallas import tpu as pltpu


# Tiled-fallback tile sizes (weight too large to keep VMEM-resident).
DEF_TM, DEF_TN, DEF_TK = 512, 1024, 512
# M tile for the weight-resident path.
DEF_TM_RES = 256
# Keep the frozen bf16 weight fully VMEM-resident below this size.
_WEIGHT_RESIDENT_MAX_BYTES = 16 * 1024 * 1024
# Scoped VMEM limit: safe on v5e/v6e (128 MiB physical) and v7x (64 MiB).
_VMEM_LIMIT = 48 * 1024 * 1024


def _round_up(x, m):
    return ((x + m - 1) // m) * m


def _pad2d(a, rows, cols):
    r, c = a.shape
    if r == rows and c == cols:
        return a  # no copy when shapes already conform
    return jnp.pad(a, ((0, rows - r), (0, cols - c)))


def _single_buffered_full_spec(shape):
    """Full-array BlockSpec with a constant index_map (1-D grid).

    The block index never changes, so the block is DMA'd once and stays
    VMEM-resident for the whole grid.  pipeline_mode=pl.Buffered(1) avoids
    allocating a useless second buffer; fall back gracefully if the running
    JAX does not accept the kwarg (then the default double buffer still fits
    the 48 MiB budget at the 16 MiB weight threshold)."""
    try:
        return pl.BlockSpec(shape, lambda i: (0,) * len(shape),
                            pipeline_mode=pl.Buffered(1))
    except (TypeError, AttributeError):
        return pl.BlockSpec(shape, lambda i: (0,) * len(shape))


# --------------------------------------------------------------------------
# Shared epilogue: per-channel sum / sum-of-squares as ones-row MXU matmuls
# (keeps the reduction on the MXU instead of a cross-sublane XLU reduce).
# bf16 operands, f32 accumulation -- negligible for BN statistics.
# --------------------------------------------------------------------------
def _channel_sums(y_f32, compute_dtype):
    tm = y_f32.shape[0]
    rows = jax.lax.broadcasted_iota(jnp.int32, (8, tm), 0)
    sel_sum = (rows == 0).astype(compute_dtype)
    sel_sq = (rows == 1).astype(compute_dtype)
    return (jnp.dot(sel_sum, y_f32.astype(compute_dtype),
                    preferred_element_type=jnp.float32)
            + jnp.dot(sel_sq, (y_f32 * y_f32).astype(compute_dtype),
                      preferred_element_type=jnp.float32))


# --------------------------------------------------------------------------
# Weight-resident matmul:  y_tile = x_tile @ W   (grid = (i over M,))
# --------------------------------------------------------------------------
def _matmul_resident_kernel(x_ref, wt_ref, o_ref, *, compute_dtype):
    x = x_ref[...].astype(compute_dtype)          # per-tile cast, no host pass
    o_ref[...] = jnp.dot(x, wt_ref[...],
                         preferred_element_type=jnp.float32).astype(o_ref.dtype)


# --------------------------------------------------------------------------
# Tiled matmul fallback:  grid = (i over M, j over N, k over K)
# --------------------------------------------------------------------------
def _matmul_tiled_kernel(x_ref, wt_ref, o_ref, acc_ref, *, compute_dtype):
    @pl.when(pl.program_id(2) == 0)
    def _():
        acc_ref[...] = jnp.zeros_like(acc_ref)

    acc_ref[...] += jnp.dot(x_ref[...].astype(compute_dtype), wt_ref[...],
                            preferred_element_type=jnp.float32)

    @pl.when(pl.program_id(2) == pl.num_programs(2) - 1)
    def _():
        o_ref[...] = acc_ref[...].astype(o_ref.dtype)


# --------------------------------------------------------------------------
# Weight-resident matmul + per-tile partial BN statistics (grid = (i over M,))
# Partial stats keep the M axis megacore-parallel; a tiny XLA reduce combines
# the (num_i, 8, Np) partials afterwards.
# --------------------------------------------------------------------------
def _matmul_bnstats_resident_kernel(x_ref, wt_ref, y_ref, pstats_ref, *,
                                    compute_dtype):
    x = x_ref[...].astype(compute_dtype)
    y = jnp.dot(x, wt_ref[...], preferred_element_type=jnp.float32)
    y_ref[...] = y.astype(y_ref.dtype)            # bf16 intermediate writeback
    pstats_ref[...] = _channel_sums(y, compute_dtype)


# --------------------------------------------------------------------------
# Tiled matmul + accumulated BN statistics (grid = (j over N, i over M, k over K))
# stats block (8, tn): row 0 = sum_y, row 1 = sum_y^2, accumulated across i & k.
# NOTE: i and k must stay 'arbitrary' (the stats block is revisited across them).
# --------------------------------------------------------------------------
def _matmul_bnstats_tiled_kernel(x_ref, wt_ref, y_ref, stats_ref, acc_ref, *,
                                 compute_dtype):
    i = pl.program_id(1)
    k = pl.program_id(2)

    @pl.when(jnp.logical_and(i == 0, k == 0))
    def _():
        stats_ref[...] = jnp.zeros_like(stats_ref)

    @pl.when(k == 0)
    def _():
        acc_ref[...] = jnp.zeros_like(acc_ref)

    acc_ref[...] += jnp.dot(x_ref[...].astype(compute_dtype), wt_ref[...],
                            preferred_element_type=jnp.float32)

    @pl.when(k == pl.num_programs(2) - 1)
    def _():
        y = acc_ref[...]
        y_ref[...] = y.astype(y_ref.dtype)        # bf16 intermediate writeback
        # Zero-padded x rows produce y == 0 and contribute nothing to the sums.
        stats_ref[...] += _channel_sums(y, compute_dtype)


# --------------------------------------------------------------------------
# BN normalize pass: folded per-channel scale/shift epilogue
#   scale = gamma * rsqrt(var + eps),  shift = beta - mean * scale
# var = E[y^2] - mean^2 with f32 sums: adequate for BN tolerances at typical
# B*S; padded channels have sum = sumsq = 0 -> var = 0 -> rsqrt(eps), harmless
# because gamma is zero-padded there (scale = shift = 0, no Inf/NaN).
# --------------------------------------------------------------------------
def _bn_normalize_kernel(y_ref, stats_ref, gamma_ref, beta_ref, o_ref, *,
                         inv_count, eps):
    mean = stats_ref[0:1, :] * inv_count
    ex2 = stats_ref[1:2, :] * inv_count
    var = ex2 - mean * mean
    scale = gamma_ref[...] * jax.lax.rsqrt(var + eps)
    shift = beta_ref[...] - mean * scale          # beta frozen at 0 in StitchNet
    o_ref[...] = (y_ref[...].astype(jnp.float32) * scale + shift).astype(o_ref.dtype)


# --------------------------------------------------------------------------
# trans == 'linear'
# --------------------------------------------------------------------------
def make_stitch_linear(weight, *, tm=DEF_TM, tn=DEF_TN, tk=DEF_TK,
                       tm_res=DEF_TM_RES, compute_dtype=jnp.bfloat16,
                       out_dtype=None,
                       max_resident_weight_bytes=_WEIGHT_RESIDENT_MAX_BYTES):
    """weight: [H_out, H_in] (nn.Linear layout). Returns fn(act[B,S,H_in]) -> [B,S,H_out].

    The frozen weight is transposed / padded / cast to bf16 ONCE here."""
    H_out, H_in = weight.shape
    Kp128 = _round_up(H_in, 128)
    Np128 = _round_up(H_out, 128)
    weight_bytes = Kp128 * Np128 * jnp.dtype(compute_dtype).itemsize
    resident = weight_bytes <= max_resident_weight_bytes

    if resident:
        Kp, Np = Kp128, Np128
        tm_cfg = tm_res
        tk_ = tn_ = None  # unused
    else:
        tk_ = min(tk, Kp128)
        tn_ = min(tn, Np128)
        Kp = _round_up(Kp128, tk_)
        Np = _round_up(Np128, tn_)
        tm_cfg = tm
    wt_pad = _pad2d(weight.T.astype(compute_dtype), Kp, Np)   # done once

    def transform(act):
        B, S, _ = act.shape
        M = B * S
        tm_eff = min(tm_cfg, _round_up(M, 16))
        Mp = _round_up(M, tm_eff)
        # Activation stays in its native dtype (cast per tile inside the kernel).
        x = _pad2d(act.reshape(M, H_in), Mp, Kp)
        odt = out_dtype if out_dtype is not None else act.dtype

        if resident:
            grid = (Mp // tm_eff,)
            cost = pl.CostEstimate(
                flops=2 * Mp * Kp * Np,
                transcendentals=0,
                bytes_accessed=(x.size * x.dtype.itemsize
                                + wt_pad.size * wt_pad.dtype.itemsize
                                + Mp * Np * jnp.dtype(odt).itemsize))
            y = pl.pallas_call(
                functools.partial(_matmul_resident_kernel,
                                  compute_dtype=compute_dtype),
                out_shape=jax.ShapeDtypeStruct((Mp, Np), odt),
                grid_spec=pltpu.PrefetchScalarGridSpec(
                    num_scalar_prefetch=0,
                    grid=grid,
                    in_specs=[
                        pl.BlockSpec((tm_eff, Kp), lambda i: (i, 0)),
                        _single_buffered_full_spec((Kp, Np)),
                    ],
                    out_specs=pl.BlockSpec((tm_eff, Np), lambda i: (i, 0)),
                ),
                compiler_params=pltpu.CompilerParams(
                    dimension_semantics=("parallel",),
                    vmem_limit_bytes=_VMEM_LIMIT),
                cost_estimate=cost,
            )(x, wt_pad)
        else:
            grid = (Mp // tm_eff, Np // tn_, Kp // tk_)
            cost = pl.CostEstimate(
                flops=2 * Mp * Kp * Np,
                transcendentals=0,
                bytes_accessed=(x.size * x.dtype.itemsize * (Np // tn_)
                                + wt_pad.size * wt_pad.dtype.itemsize * (Mp // tm_eff)
                                + Mp * Np * jnp.dtype(odt).itemsize))
            y = pl.pallas_call(
                functools.partial(_matmul_tiled_kernel,
                                  compute_dtype=compute_dtype),
                out_shape=jax.ShapeDtypeStruct((Mp, Np), odt),
                grid_spec=pltpu.PrefetchScalarGridSpec(
                    num_scalar_prefetch=0,
                    grid=grid,
                    in_specs=[
                        pl.BlockSpec((tm_eff, tk_), lambda i, j, k: (i, k)),
                        pl.BlockSpec((tk_, tn_), lambda i, j, k: (k, j)),
                    ],
                    out_specs=pl.BlockSpec((tm_eff, tn_), lambda i, j, k: (i, j)),
                    scratch_shapes=[pltpu.VMEM((tm_eff, tn_), jnp.float32)],
                ),
                compiler_params=pltpu.CompilerParams(
                    dimension_semantics=("parallel", "parallel", "arbitrary"),
                    vmem_limit_bytes=_VMEM_LIMIT),
                cost_estimate=cost,
            )(x, wt_pad)
        return y[:M, :H_out].reshape(B, S, H_out)

    return jax.jit(transform)


# --------------------------------------------------------------------------
# trans == 'linearbn'
# --------------------------------------------------------------------------
def make_stitch_linearbn(weight, gamma, beta, *, tm=DEF_TM, tn=DEF_TN,
                         tk=DEF_TK, tm_res=DEF_TM_RES,
                         compute_dtype=jnp.bfloat16, out_dtype=None, eps=1e-5,
                         max_resident_weight_bytes=_WEIGHT_RESIDENT_MAX_BYTES):
    """Linear -> (permute) -> BatchNorm1d(H) -> (permute); batch stats over B*S
    rows (training-mode BN, biased variance), affine gamma, beta frozen at 0."""
    H_out, H_in = weight.shape
    Kp128 = _round_up(H_in, 128)
    Np128 = _round_up(H_out, 128)
    weight_bytes = Kp128 * Np128 * jnp.dtype(compute_dtype).itemsize
    resident = weight_bytes <= max_resident_weight_bytes

    if resident:
        Kp, Np = Kp128, Np128
        tm_cfg = tm_res
        tk_ = tn_ = None  # unused
    else:
        tk_ = min(tk, Kp128)
        tn_ = min(tn, Np128)
        Kp = _round_up(Kp128, tk_)
        Np = _round_up(Np128, tn_)
        tm_cfg = tm
    wt_pad = _pad2d(weight.T.astype(compute_dtype), Kp, Np)            # once
    gamma_pad = _pad2d(gamma.reshape(1, H_out).astype(jnp.float32), 1, Np)
    beta_pad = _pad2d(beta.reshape(1, H_out).astype(jnp.float32), 1, Np)

    def transform(act):
        B, S, _ = act.shape
        M = B * S
        tm_eff = min(tm_cfg, _round_up(M, 16))
        Mp = _round_up(M, tm_eff)
        num_i = Mp // tm_eff
        x = _pad2d(act.reshape(M, H_in), Mp, Kp)
        odt = out_dtype if out_dtype is not None else act.dtype

        # ---- Pass 1: matmul fused with per-channel sum / sumsq ----
        if resident:
            cost1 = pl.CostEstimate(
                flops=2 * Mp * Kp * Np + 4 * Mp * Np,
                transcendentals=0,
                bytes_accessed=(x.size * x.dtype.itemsize
                                + wt_pad.size * wt_pad.dtype.itemsize
                                + Mp * Np * 2 + num_i * 8 * Np * 4))
            y, pstats = pl.pallas_call(
                functools.partial(_matmul_bnstats_resident_kernel,
                                  compute_dtype=compute_dtype),
                out_shape=(jax.ShapeDtypeStruct((Mp, Np), compute_dtype),
                           jax.ShapeDtypeStruct((num_i * 8, Np), jnp.float32)),
                grid_spec=pltpu.PrefetchScalarGridSpec(
                    num_scalar_prefetch=0,
                    grid=(num_i,),
                    in_specs=[
                        pl.BlockSpec((tm_eff, Kp), lambda i: (i, 0)),
                        _single_buffered_full_spec((Kp, Np)),
                    ],
                    out_specs=(
                        pl.BlockSpec((tm_eff, Np), lambda i: (i, 0)),
                        pl.BlockSpec((8, Np), lambda i: (i, 0)),
                    ),
                ),
                compiler_params=pltpu.CompilerParams(
                    dimension_semantics=("parallel",),
                    vmem_limit_bytes=_VMEM_LIMIT),
                cost_estimate=cost1,
            )(x, wt_pad)
            # Tiny cross-tile reduction of the per-tile partial stats (XLA).
            stats = pstats.reshape(num_i, 8, Np).sum(axis=0)
        else:
            grid1 = (Np // tn_, num_i, Kp // tk_)  # j parallel; i,k arbitrary
            cost1 = pl.CostEstimate(
                flops=2 * Mp * Kp * Np + 4 * Mp * Np,
                transcendentals=0,
                bytes_accessed=(x.size * x.dtype.itemsize * (Np // tn_)
                                + wt_pad.size * wt_pad.dtype.itemsize
                                + Mp * Np * 2 + 8 * Np * 4))
            y, stats = pl.pallas_call(
                functools.partial(_matmul_bnstats_tiled_kernel,
                                  compute_dtype=compute_dtype),
                out_shape=(jax.ShapeDtypeStruct((Mp, Np), compute_dtype),
                           jax.ShapeDtypeStruct((8, Np), jnp.float32)),
                grid_spec=pltpu.PrefetchScalarGridSpec(
                    num_scalar_prefetch=0,
                    grid=grid1,
                    in_specs=[
                        pl.BlockSpec((tm_eff, tk_), lambda j, i, k: (i, k)),
                        pl.BlockSpec((tk_, tn_), lambda j, i, k: (k, j)),
                    ],
                    out_specs=(
                        pl.BlockSpec((tm_eff, tn_), lambda j, i, k: (i, j)),
                        pl.BlockSpec((8, tn_), lambda j, i, k: (0, j)),
                    ),
                    scratch_shapes=[pltpu.VMEM((tm_eff, tn_), jnp.float32)],
                ),
                compiler_params=pltpu.CompilerParams(
                    # i and k MUST stay 'arbitrary': the (8, tn) stats block is
                    # accumulated across them (megacore race otherwise).
                    dimension_semantics=("parallel", "arbitrary", "arbitrary"),
                    vmem_limit_bytes=_VMEM_LIMIT),
                cost_estimate=cost1,
            )(x, wt_pad)

        # ---- Pass 2: streaming normalize with folded scale/shift ----
        if resident:
            tn2 = Np
            f = 1
            for cand in (8, 4, 2):  # amortize per-step overhead, cap block ~8 MiB
                if num_i % cand == 0 and cand * tm_eff * Np * 4 <= 8 * 1024 * 1024:
                    f = cand
                    break
            tm2 = tm_eff * f
        else:
            tm2 = tm_eff
            tn2 = tn_
        grid2 = (Mp // tm2, Np // tn2)
        cost2 = pl.CostEstimate(
            flops=2 * Mp * Np,
            transcendentals=Np * grid2[0],
            bytes_accessed=Mp * Np * 2 + Mp * Np * jnp.dtype(odt).itemsize)
        out = pl.pallas_call(
            functools.partial(_bn_normalize_kernel, inv_count=1.0 / M, eps=eps),
            out_shape=jax.ShapeDtypeStruct((Mp, Np), odt),
            grid_spec=pltpu.PrefetchScalarGridSpec(
                num_scalar_prefetch=0,
                grid=grid2,
                in_specs=[
                    pl.BlockSpec((tm2, tn2), lambda i, j: (i, j)),
                    pl.BlockSpec((8, tn2), lambda i, j: (0, j)),
                    pl.BlockSpec((1, tn2), lambda i, j: (0, j)),
                    pl.BlockSpec((1, tn2), lambda i, j: (0, j)),
                ],
                out_specs=pl.BlockSpec((tm2, tn2), lambda i, j: (i, j)),
            ),
            compiler_params=pltpu.CompilerParams(
                dimension_semantics=("parallel", "parallel"),
                vmem_limit_bytes=_VMEM_LIMIT),
            cost_estimate=cost2,
        )(y, stats, gamma_pad, beta_pad)
        return out[:M, :H_out].reshape(B, S, H_out)

    return jax.jit(transform)


# --------------------------------------------------------------------------
# Demo / correctness check
# --------------------------------------------------------------------------
if __name__ == "__main__":
    # Small shapes consistent with the module: hidden_size=32, batch=2, seq=8.
    B, S, H = 2, 8, 32
    eps = 1e-5

    key = jax.random.PRNGKey(0)
    k_act, k_w, k_g = jax.random.split(key, 3)

    # Surrogate for outputs['hidden_states'][layer_idx + 1] from model1.
    act = jax.random.normal(k_act, (B, S, H), dtype=jnp.float32)

    # nn.Linear weight: [H_out, H_in], no bias. BN gamma (affine), beta frozen at 0.
    w_linear = jax.random.normal(k_w, (H, H), dtype=jnp.float32) / jnp.sqrt(H)
    bn_gamma = 1.0 + 0.1 * jax.random.normal(k_g, (H,), dtype=jnp.float32)
    bn_beta = jnp.zeros((H,), dtype=jnp.float32)

    # References modelling the same numerics (bf16 inputs, f32 accumulation).
    act_c = act.astype(jnp.bfloat16).astype(jnp.float32)
    w_c = w_linear.astype(jnp.bfloat16).astype(jnp.float32)
    ref_linear = jnp.einsum("bsh,oh->bso", act_c, w_c)
    y_flat = ref_linear.reshape(B * S, H)
    mean = jnp.mean(y_flat, axis=0, keepdims=True)
    var = jnp.mean((y_flat - mean) ** 2, axis=0, keepdims=True)
    ref_linearbn = ((y_flat - mean) * jax.lax.rsqrt(var + eps) * bn_gamma[None, :]
                    + bn_beta[None, :]).reshape(B, S, H)

    # Exercise both the weight-resident fast path and the tiled fallback.
    for max_res in (_WEIGHT_RESIDENT_MAX_BYTES, 0):
        # trans == 'linear' (default)
        linear_fn = make_stitch_linear(w_linear,
                                       max_resident_weight_bytes=max_res)
        out_linear = jax.block_until_ready(linear_fn(act))
        assert out_linear.shape == (B, S, H)
        assert jnp.allclose(out_linear, ref_linear, atol=2e-2, rtol=2e-2)

        # trans == 'linearbn'
        linearbn_fn = make_stitch_linearbn(w_linear, bn_gamma, bn_beta, eps=eps,
                                           max_resident_weight_bytes=max_res)
        out_bn = jax.block_until_ready(linearbn_fn(act))
        assert out_bn.shape == (B, S, H)
        assert jnp.allclose(out_bn, ref_linearbn, atol=3e-2, rtol=3e-2)

    print("KERNEL_OK")
</pallas_src>

<mosaic_0001>
module attributes {stable_mosaic.version = 11 : i64} {
  func.func @_matmul_resident_kernel(%arg0: i32, %arg1: memref<16x128xf32, #tpu.memory_space<vmem>>, %arg2: memref<128x128xbf16, #tpu.memory_space<vmem>>, %arg3: memref<16x128xf32, #tpu.memory_space<vmem>>) attributes {dimension_semantics = [#tpu.dimension_semantics<parallel>], iteration_bounds = array<i64: 1>, scalar_prefetch = 0 : i64, scratch_operands = 0 : i64, tpu.core_type = #tpu.core_type<tc>, window_params = [{transform_indices = @transform_0, window_bounds = array<i64: 16, 128>}, {pipeline_mode = #tpu.pipeline_mode<synchronous>, transform_indices = @transform_1, window_bounds = array<i64: 128, 128>}, {transform_indices = @transform_2, window_bounds = array<i64: 16, 128>}]} {
    %c0 = arith.constant 0 : index
    %c0_0 = arith.constant 0 : index
    %0 = vector.load %arg1[%c0, %c0_0] : memref<16x128xf32, #tpu.memory_space<vmem>>, vector<16x128xf32>
    %1 = arith.truncf %0 : vector<16x128xf32> to vector<16x128xbf16>
    %c0_1 = arith.constant 0 : index
    %c0_2 = arith.constant 0 : index
    %2 = vector.load %arg2[%c0_1, %c0_2] : memref<128x128xbf16, #tpu.memory_space<vmem>>, vector<128x128xbf16>
    %cst = arith.constant dense<0.000000e+00> : vector<16x128xf32>
    %3 = tpu.matmul %1, %2, %cst {dimension_numbers = #tpu.dot_dimension_numbers<[1], [0], [0], [1], [0, 0, 1, 1], [], []>} : vector<16x128xbf16>, vector<128x128xbf16>, vector<16x128xf32> -> vector<16x128xf32>
    %c0_3 = arith.constant 0 : index
    %c0_4 = arith.constant 0 : index
    %4 = vector.load %arg3[%c0_3, %c0_4] : memref<16x128xf32, #tpu.memory_space<vmem>>, vector<16x128xf32>
    tpu.vector_store %arg3[%c0_3, %c0_4], %3 {strides = array<i32>} : memref<16x128xf32, #tpu.memory_space<vmem>>, vector<16x128xf32>,
    return
  }
  func.func @transform_0(%arg0: i32) -> (i32, i32) {
    %c0_i32 = arith.constant 0 : i32
    %c0_i32_0 = arith.constant 0 : i32
    return %arg0, %c0_i32 : i32, i32
  }
  func.func @transform_1(%arg0: i32) -> (i32, i32) {
    %c0_i32 = arith.constant 0 : i32
    %c0_i32_0 = arith.constant 0 : i32
    %c0_i32_1 = arith.constant 0 : i32
    return %c0_i32, %c0_i32_0 : i32, i32
  }
  func.func @transform_2(%arg0: i32) -> (i32, i32) {
    %c0_i32 = arith.constant 0 : i32
    %c0_i32_0 = arith.constant 0 : i32
    return %arg0, %c0_i32 : i32, i32
  }
}

</mosaic_0001>

<llo_original>
// kernel: transform.1
$region0: #{transform.1}
  #allocation0 [shape = 'u32[]', space=smem, size = 0x4, offset = 0x4, fixed_abs, tag = 'smem constant byte address 0x4 - core index']
  #allocation1 [shape = 'u32[144,128]{1,0:T(1,128)}', space=vmem, size = 0x12000, scoped, tag = 'internal scratch']
  %s0 = inlined_call_operand.vmem [shape: f32[16,128], index: 0, kind: input, shape index: {}]
  %s1 = inlined_call_operand.hbm [shape: bf16[128,128], index: 1, kind: input, shape index: {}]
  %s2 = inlined_call_operand.vmem [shape: f32[16,128], index: 2, kind: output, shape index: {}]
  %s3 = sld [smem:[#allocation0]]
  $region22: #{transform.1} parent=0
    _
  %s5 = ssub.s32 1, %s3
  %s6 = scalar_select 0, %s5, %s3
  $region1: #{transform.1} parent=0
    #allocation2 [shape = 'u8[32768]{0}', space=vmem, size = 0x8000, scoped, tag = 'input window, operand 1, single buffered']
    #allocation3 [shape = 's32[1]{0}', space=sflag, size = 0x4, scoped, tag = 'scoped memory for transform.1']
    %7 = vsyncpa [#allocation3], 0
    // Predicated region
    $region2: #{transform.1} parent=1 // pred_check
      _
    $region3: #{transform.1} parent=1 // pred_check_branch
      %9 = sbr.rel (0) target = $region5
    $region4: #{transform.1} parent=1 // pred_region
      _
    $region5: #{transform.1} parent=1 // pred_fallthru
      _
    // Predicated region
    $region6: #{transform.1} parent=1 // pred_check
      _
    $region7: #{transform.1} parent=1 // pred_check_branch
      %11 = sbr.rel (0) target = $region9
    $region8: #{transform.1} parent=1 // pred_region
      %s13 = ssub.s32 1024, 1024
      %14 = vsyncadd [#allocation3], %s13
      %s15 = sshll.u32 [#allocation2], 4
      %s16 = int_to_ptr.vmem [resolvable:$true] %s15
      %21 = dma.hbm_to_vmem [thread:$0]  %s1, 1024, %s16, [#allocation3], 64, 64, 4
    $region9: #{transform.1} parent=1 // pred_fallthru
      _
    // Predicated region
    $region10: #{transform.1} parent=1 // pred_check
      _
    $region11: #{transform.1} parent=1 // pred_check_branch
      %23 = sbr.rel (0) target = $region13
    $region12: #{transform.1} parent=1 // pred_region
      %24 = dma.done [#allocation3], 1024
    $region13: #{transform.1} parent=1 // pred_fallthru
      _
    %v26 = vld [vmem:[%s0] sm:$0xff]
    %v27 = vld [vmem:[%s0 + $0x8] sm:$0xff]
    %v28 = vpack.c.bf16 %v27, %v26
    %v29 = vld [vmem:[#allocation2] sm:$0xf]
    %v30 = vld [vmem:[#allocation2 + $0x4] sm:$0xf]
    %v31 = vld [vmem:[#allocation2 + $0x8] sm:$0xf]
    %v32 = vld [vmem:[#allocation2 + $0xc] sm:$0xf]
    %v33 = vld [vmem:[#allocation2 + $0x10] sm:$0xf]
    %v34 = vld [vmem:[#allocation2 + $0x14] sm:$0xf]
    %v35 = vld [vmem:[#allocation2 + $0x18] sm:$0xf]
    %v36 = vld [vmem:[#allocation2 + $0x1c] sm:$0xf]
    %v37 = vld [vmem:[#allocation2 + $0x20] sm:$0xf]
    %v38 = vld [vmem:[#allocation2 + $0x24] sm:$0xf]
    %v39 = vld [vmem:[#allocation2 + $0x28] sm:$0xf]
    %v40 = vld [vmem:[#allocation2 + $0x2c] sm:$0xf]
    %v41 = vld [vmem:[#allocation2 + $0x30] sm:$0xf]
    %v42 = vld [vmem:[#allocation2 + $0x34] sm:$0xf]
    %v43 = vld [vmem:[#allocation2 + $0x38] sm:$0xf]
    %v44 = vld [vmem:[#allocation2 + $0x3c] sm:$0xf]
    %v61 = vunpack.c.l.b16 %v29
    %v62 = vunpack.c.l.b16 %v30
    %v63 = vunpack.c.l.b16 %v31
    %v64 = vunpack.c.l.b16 %v32
    %v65 = vunpack.c.l.b16 %v33
    %v66 = vunpack.c.l.b16 %v34
    %v67 = vunpack.c.l.b16 %v35
    %v68 = vunpack.c.l.b16 %v36
    %v69 = vunpack.c.l.b16 %v37
    %v70 = vunpack.c.l.b16 %v38
    %v71 = vunpack.c.l.b16 %v39
    %v72 = vunpack.c.l.b16 %v40
    %v73 = vunpack.c.l.b16 %v41
    %v74 = vunpack.c.l.b16 %v42
    %v75 = vunpack.c.l.b16 %v43
    %v76 = vunpack.c.l.b16 %v44
    %v77 = vpack.c.b16 %v62, %v61
    %v78 = vpack.c.b16 %v64, %v63
    %v79 = vpack.c.b16 %v66, %v65
    %v80 = vpack.c.b16 %v68, %v67
    %v81 = vpack.c.b16 %v70, %v69
    %v82 = vpack.c.b16 %v72, %v71
    %v83 = vpack.c.b16 %v74, %v73
    %v84 = vpack.c.b16 %v76, %v75
    %93 = vmatprep.subr.bf16.mxu0 0
    %94 = vmatpush1.bf16.msra.mxu0 %v84
    %95 = vmatprep.subr.bf16.mxu0 0
    %96 = vmatpush1.bf16.msra.mxu0 %v83
    %97 = vmatprep.subr.bf16.mxu0 0
    %98 = vmatpush1.bf16.msra.mxu0 %v82
    %99 = vmatprep.subr.bf16.mxu0 0
    %100 = vmatpush1.bf16.msra.mxu0 %v81
    %101 = vmatprep.subr.bf16.mxu0 0
    %102 = vmatpush1.bf16.msra.mxu0 %v80
    %103 = vmatprep.subr.bf16.mxu0 0
    %104 = vmatpush1.bf16.msra.mxu0 %v79
    %105 = vmatprep.subr.bf16.mxu0 0
    %106 = vmatpush1.bf16.msra.mxu0 %v78
    %107 = vmatprep.subr.bf16.mxu0 0
    %108 = vmatpush1.bf16.msra.mxu0 %v77
    %109 = vmatprep.subr.bf16.mxu0 0
    %110 = vmatpush2.bf16.msra.mxu0 0
    %111 = vmatprep.subr.bf16.mxu0 0
    %112 = vmatpush2.bf16.msra.mxu0 0
    %113 = vmatprep.subr.bf16.mxu0 0
    %114 = vmatpush2.bf16.msra.mxu0 0
    %115 = vmatprep.subr.bf16.mxu0 0
    %116 = vmatpush2.bf16.msra.mxu0 0
    %117 = vmatprep.subr.bf16.mxu0 0
    %118 = vmatpush2.bf16.msra.mxu0 0
    %119 = vmatprep.subr.bf16.mxu0 0
    %120 = vmatpush2.bf16.msra.mxu0 0
    %121 = vmatprep.subr.bf16.mxu0 0
    %122 = vmatpush2.bf16.msra.mxu0 0
    %123 = vmatprep.subr.bf16.mxu0 0
    %124 = vmatpush2.bf16.msra.mxu0 0
    %125 = vmatprep.mubr.bf16.mxu0 0
    %126 = vmatmul.mubr.bf16.gmra.mxu0 %v28
    %v127 = vpop.f32.mrf.mxu0
    %v128 = vadd.f32 0.0, %v127
    %v129 = vpop.f32.mrf.mxu0
    %v130 = vpop.f32.mrf.mxu0
    %v131 = vadd.f32 0.0, %v130
    %v132 = vpop.f32.mrf.mxu0
    %133 = vdwg.mxu0
    %134 = vst [vmem:[%s2] sm:$0xff] %v128
    %135 = vst [vmem:[%s2 + $0x8] sm:$0xff] %v131
    // Predicated region
    $region14: #{transform.1} parent=1 // pred_check
      _
    $region15: #{transform.1} parent=1 // pred_check_branch
      %137 = sbr.rel (0) target = $region17
    $region16: #{transform.1} parent=1 // pred_region
      _
    $region17: #{transform.1} parent=1 // pred_fallthru
      _
    // Predicated region
    $region18: #{transform.1} parent=1 // pred_check
      _
    $region19: #{transform.1} parent=1 // pred_check_branch
      %139 = sbr.rel (0) target = $region21
    $region20: #{transform.1} parent=1 // pred_region
      _
    $region21: #{transform.1} parent=1 // pred_fallthru
      _
    %140 = vsyncpa [#allocation3], 1

</llo_original>
